<compile_context>
chip_gen: v7x
topology: tpu7x:2x2x1
jax: 0.10.0
libtpu: 0.0.40
codegen_flags: <defaults>
</compile_context>

<pallas_src>
import jax
import jax.numpy as jnp
from jax import lax
from jax.experimental import pallas as pl
from jax.experimental.pallas import tpu as pltpu

FEATURE_DIM = 512   # dim the module's fc_input expects from the CNN backbone
LANE = 128
SUBLANE = 8
CNN_TK = 256        # K-tile for the CNN projection matmul


def _round_up(n, m):
    return ((n + m - 1) // m) * m


def _pad_to(x, axis, mult):
    pad = (-x.shape[axis]) % mult
    if pad == 0:
        return x
    widths = [(0, 0)] * x.ndim
    widths[axis] = (0, pad)
    return jnp.pad(x, widths)


# ---------------------------------------------------------------------------
# Kernel 1: K-tiled matmul + bias (CNN backbone stand-in: flatten @ W + b).
# Grid = (M-tiles, N-tiles, K-tiles); f32 accumulator scratch; parallel M/N.
# ---------------------------------------------------------------------------
def _matmul_bias_kernel(x_ref, w_ref, b_ref, o_ref, acc_ref):
    @pl.when(pl.program_id(2) == 0)
    def _():
        acc_ref[...] = jnp.zeros_like(acc_ref)

    acc_ref[...] += jnp.dot(x_ref[...], w_ref[...],
                            preferred_element_type=jnp.float32)

    @pl.when(pl.program_id(2) == pl.num_programs(2) - 1)
    def _():
        o_ref[...] = acc_ref[...] + b_ref[...]


def matmul_bias(x, w, b, *, tn=512, tk=CNN_TK):
    """x: (M, K) bf16, w: (K, N) bf16, b: (1, N) f32 -> (M, N) f32."""
    M, K = x.shape
    _, N = w.shape
    tm = M                       # batch rows are small; one full-M tile
    tn = min(tn, N)
    tk = min(tk, K)
    grid = (M // tm, N // tn, K // tk)
    return pl.pallas_call(
        _matmul_bias_kernel,
        out_shape=jax.ShapeDtypeStruct((M, N), jnp.float32),
        grid_spec=pltpu.PrefetchScalarGridSpec(
            num_scalar_prefetch=0,
            grid=grid,
            in_specs=[
                pl.BlockSpec((tm, tk), lambda i, j, k: (i, k)),
                pl.BlockSpec((tk, tn), lambda i, j, k: (k, j)),
                pl.BlockSpec((1, tn), lambda i, j, k: (0, j)),
            ],
            out_specs=pl.BlockSpec((tm, tn), lambda i, j, k: (i, j)),
            scratch_shapes=[pltpu.VMEM((tm, tn), jnp.float32)],
        ),
        compiler_params=pltpu.CompilerParams(
            dimension_semantics=("parallel", "parallel", "arbitrary"),
            vmem_limit_bytes=48 * 1024 * 1024,
        ),
    )(x, w, b)


# ---------------------------------------------------------------------------
# Kernel 2: fused (fc_input ∘ LSTM-input-projection) + LSTM recurrence + fc.
#
# Inputs (all padded / lane-aligned, weights bf16, biases f32):
#   feat:    (B, 512)        bf16   CNN features
#   emb:     (T*B, E)        bf16   time-major caption embeddings
#   w_featg: (512, 4H)       bf16   W_feat @ W_ih   (folded, gate order i,f,g,o)
#   w_embg:  (E, 4H)         bf16   W_emb  @ W_ih   (folded)
#   b_g:     (1, 4H)         f32    b_fcin @ W_ih + b_ih + b_hh (folded)
#   w_hh:    (H, 4H)         bf16   LSTM hidden weights
#   fc_w:    (H, V), fc_b: (1, V)   final fc
# Output: (T*B, V) f32 logits (time-major), lane-dense.
# ---------------------------------------------------------------------------
def _caption_kernel(feat_ref, emb_ref, wfg_ref, weg_ref, bg_ref,
                    whh_ref, fcw_ref, fcb_ref,
                    out_ref, gx_scr, hseq_scr):
    B = feat_ref.shape[0]
    TB = emb_ref.shape[0]
    T = TB // B
    H = whh_ref.shape[0]

    # Per-batch constant contribution of the image features + all biases.
    g_feat = jnp.dot(feat_ref[...], wfg_ref[...],
                     preferred_element_type=jnp.float32) + bg_ref[...]         # (B, 4H)
    # Input->gates projection for every timestep, one big matmul.
    gx_scr[...] = jnp.dot(emb_ref[...], weg_ref[...],
                          preferred_element_type=jnp.float32)                  # (T*B, 4H)

    def step(t, carry):
        h, c = carry
        row = pl.multiple_of(t * B, B)
        g = (gx_scr[pl.ds(row, B), :] + g_feat +
             jnp.dot(h.astype(jnp.bfloat16), whh_ref[...],
                     preferred_element_type=jnp.float32))                      # (B, 4H)
        # gate slices are lane-aligned because H is padded to a multiple of 128
        i_g = jax.nn.sigmoid(g[:, 0 * H:1 * H])
        f_g = jax.nn.sigmoid(g[:, 1 * H:2 * H])
        g_g = jnp.tanh(g[:, 2 * H:3 * H])
        o_g = jax.nn.sigmoid(g[:, 3 * H:4 * H])
        c_new = f_g * c + i_g * g_g
        h_new = o_g * jnp.tanh(c_new)
        hseq_scr[pl.ds(row, B), :] = h_new
        return h_new, c_new

    zeros = jnp.zeros((B, H), jnp.float32)
    lax.fori_loop(0, T, step, (zeros, zeros), unroll=True)

    # final fc over all timesteps at once; V is padded to 128 -> dense stores
    out_ref[...] = (jnp.dot(hseq_scr[...].astype(jnp.bfloat16), fcw_ref[...],
                            preferred_element_type=jnp.float32)
                    + fcb_ref[...])                                            # (T*B, V)


def fused_caption_decode(features, emb_tb, pp):
    B_pad = features.shape[0]
    TB, E_p = emb_tb.shape
    H_p = pp["w_hh"].shape[0]
    V_p = pp["fc_w"].shape[1]
    return pl.pallas_call(
        _caption_kernel,
        out_shape=jax.ShapeDtypeStruct((TB, V_p), jnp.float32),
        grid_spec=pltpu.PrefetchScalarGridSpec(
            num_scalar_prefetch=0,
            grid=(1,),
            in_specs=[
                pl.BlockSpec((B_pad, FEATURE_DIM), lambda i: (0, 0)),
                pl.BlockSpec((TB, E_p), lambda i: (0, 0)),
                pl.BlockSpec((FEATURE_DIM, 4 * H_p), lambda i: (0, 0)),
                pl.BlockSpec((E_p, 4 * H_p), lambda i: (0, 0)),
                pl.BlockSpec((1, 4 * H_p), lambda i: (0, 0)),
                pl.BlockSpec((H_p, 4 * H_p), lambda i: (0, 0)),
                pl.BlockSpec((H_p, V_p), lambda i: (0, 0)),
                pl.BlockSpec((1, V_p), lambda i: (0, 0)),
            ],
            out_specs=pl.BlockSpec((TB, V_p), lambda i: (0, 0)),
            scratch_shapes=[
                pltpu.VMEM((TB, 4 * H_p), jnp.float32),   # hoisted gate inputs
                pltpu.VMEM((TB, H_p), jnp.float32),       # full hidden sequence
            ],
        ),
        compiler_params=pltpu.CompilerParams(
            dimension_semantics=("arbitrary",),
        ),
    )(features, emb_tb, pp["w_featg"], pp["w_embg"], pp["b_gates"],
      pp["w_hh"], pp["fc_w"], pp["fc_b"])


# ---------------------------------------------------------------------------
# Parameters (logical shapes mirror the PyTorch module) and TPU-padded copies.
# ---------------------------------------------------------------------------
def init_params(key, vocab_size, embedding_dim, hidden_dim, img_flat_dim):
    ks = jax.random.split(key, 6)
    s = 0.02
    return {
        "cnn_w": s * jax.random.normal(ks[0], (img_flat_dim, FEATURE_DIM), jnp.float32),
        "cnn_b": jnp.zeros((1, FEATURE_DIM), jnp.float32),
        "embedding": s * jax.random.normal(ks[1], (vocab_size, embedding_dim), jnp.float32),
        "fc_in_w": s * jax.random.normal(
            ks[2], (FEATURE_DIM + embedding_dim, embedding_dim), jnp.float32),
        "fc_in_b": jnp.zeros((1, embedding_dim), jnp.float32),
        # NOTE: PyTorch nn.LSTM stores (4H, in) weights and two biases; here we
        # use transposed (in, 4H) weights and a pre-summed bias (b_ih + b_hh).
        "w_ih": 0.1 * jax.random.normal(ks[3], (embedding_dim, 4 * hidden_dim), jnp.float32),
        "w_hh": 0.1 * jax.random.normal(ks[4], (hidden_dim, 4 * hidden_dim), jnp.float32),
        "b_lstm": jnp.zeros((1, 4 * hidden_dim), jnp.float32),
        "fc_w": s * jax.random.normal(ks[5], (hidden_dim, vocab_size), jnp.float32),
        "fc_b": jnp.zeros((1, vocab_size), jnp.float32),
    }


def pad_params(p):
    """Fold fc_input into the LSTM input projection, pad to lane/sublane-aligned
    shapes, and cast matmul operands to bf16 (done once, outside the kernels)."""
    E = p["embedding"].shape[1]
    H = p["w_hh"].shape[0]
    V = p["fc_w"].shape[1]
    E_p = _round_up(E, LANE)
    H_p = _round_up(H, LANE)

    w_feat = p["fc_in_w"][:FEATURE_DIM]   # (512, E)
    w_emb = p["fc_in_w"][FEATURE_DIM:]    # (E, E)

    # Exact algebraic fold (fc_input has no nonlinearity before the LSTM's W_ih):
    #   gates_x = (feat@W_feat + emb@W_emb + b_fcin) @ W_ih + b_lstm
    #           = feat @ (W_feat@W_ih) + emb @ (W_emb@W_ih) + (b_fcin@W_ih + b_lstm)
    w_featg = w_feat @ p["w_ih"]                               # (512, 4H) f32
    w_embg = w_emb @ p["w_ih"]                                 # (E, 4H)   f32
    b_gates = p["fc_in_b"] @ p["w_ih"] + p["b_lstm"]           # (1, 4H)   f32

    def gatepad(w):  # pad each of the 4 gate column blocks H -> H_p separately
        lead = w.shape[:-1]
        w4 = w.reshape(lead + (4, H))
        widths = [(0, 0)] * (w4.ndim - 1) + [(0, H_p - H)]
        return jnp.pad(w4, widths).reshape(lead + (4 * H_p,))

    return {
        "vocab_size": V,
        "cnn_w": _pad_to(p["cnn_w"], 0, CNN_TK).astype(jnp.bfloat16),
        "cnn_b": p["cnn_b"].astype(jnp.float32),
        "embedding": _pad_to(p["embedding"], 1, LANE).astype(jnp.bfloat16),
        "w_featg": gatepad(w_featg).astype(jnp.bfloat16),
        "w_embg": _pad_to(gatepad(w_embg), 0, LANE).astype(jnp.bfloat16),
        "b_gates": gatepad(b_gates).astype(jnp.float32),
        "w_hh": _pad_to(gatepad(p["w_hh"]), 0, LANE).astype(jnp.bfloat16),
        "fc_w": _pad_to(_pad_to(p["fc_w"], 1, LANE), 0, LANE).astype(jnp.bfloat16),
        "fc_b": _pad_to(p["fc_b"], 1, LANE).astype(jnp.float32),
    }


# ---------------------------------------------------------------------------
# Full forward pass (mirrors ImageCaptioningModel.forward)
# ---------------------------------------------------------------------------
def image_captioning_forward(pp, images, captions):
    B, C, Hi, Wi = images.shape
    T = captions.shape[1]
    V = pp["vocab_size"]
    E_p = pp["w_embg"].shape[0]

    # features = self.cnn(images)   [stand-in: flatten + K-tiled linear]
    x_flat = images.reshape(B, C * Hi * Wi)
    x_flat = _pad_to(_pad_to(x_flat, 0, SUBLANE), 1, CNN_TK).astype(jnp.bfloat16)
    features = matmul_bias(x_flat, pp["cnn_w"], pp["cnn_b"])       # (B_pad, 512) f32
    features = features.astype(jnp.bfloat16)
    B_pad = features.shape[0]

    # captions_embed = self.embedding(captions)  (gather left as plain-JAX glue)
    emb = jnp.take(pp["embedding"], captions, axis=0)              # (B, T, E_p) bf16
    emb = _pad_to(emb, 0, SUBLANE)                                 # (B_pad, T, E_p)
    emb_tb = jnp.transpose(emb, (1, 0, 2)).reshape(T * B_pad, E_p)

    # fused: (fc_input ∘ W_ih) -> LSTM recurrence -> fc, all in one kernel
    logits = fused_caption_decode(features, emb_tb, pp)            # (T*B_pad, V_p)
    logits = logits.reshape(T, B_pad, -1).transpose(1, 0, 2)       # (B_pad, T, V_p)
    return logits[:B, :, :V]                                       # (B, T, vocab)


if __name__ == "__main__":
    B, C, HI, WI = 2, 3, 16, 16        # images (NCHW)
    T = 8                              # caption length
    VOCAB = 40
    EMB = 32
    HID = 32

    key = jax.random.PRNGKey(0)
    k_img, k_cap, k_par = jax.random.split(key, 3)

    images = jax.random.normal(k_img, (B, C, HI, WI), jnp.float32)
    captions = jax.random.randint(k_cap, (B, T), 0, VOCAB, jnp.int32)

    params = init_params(k_par, VOCAB, EMB, HID, C * HI * WI)
    pp = pad_params(params)            # padded / bf16 / folded kernel-ready params (once)

    out = image_captioning_forward(pp, images, captions)
    out = jax.block_until_ready(out)
    assert out.shape == (B, T, VOCAB), out.shape
    assert bool(jnp.all(jnp.isfinite(out)))
    print("KERNEL_OK")
</pallas_src>

<mosaic_0001>
module attributes {stable_mosaic.version = 11 : i64} {
  func.func @_matmul_bias_kernel(%arg0: i32, %arg1: i32, %arg2: i32, %arg3: memref<8x256xbf16, #tpu.memory_space<vmem>>, %arg4: memref<256x512xbf16, #tpu.memory_space<vmem>>, %arg5: memref<1x512xf32, #tpu.memory_space<vmem>>, %arg6: memref<8x512xf32, #tpu.memory_space<vmem>>, %arg7: memref<8x512xf32, #tpu.memory_space<vmem>>) attributes {dimension_semantics = [#tpu.dimension_semantics<parallel>, #tpu.dimension_semantics<parallel>, #tpu.dimension_semantics<arbitrary>], iteration_bounds = array<i64: 1, 1, 3>, scalar_prefetch = 0 : i64, scratch_operands = 1 : i64, tpu.core_type = #tpu.core_type<tc>, window_params = [{transform_indices = @transform_0, window_bounds = array<i64: 8, 256>}, {transform_indices = @transform_1, window_bounds = array<i64: 256, 512>}, {transform_indices = @transform_2, window_bounds = array<i64: 1, 512>}, {transform_indices = @transform_3, window_bounds = array<i64: 8, 512>}]} {
    %c0_i32 = arith.constant 0 : i32
    %0 = arith.cmpi eq, %arg2, %c0_i32 : i32
    %1 = arith.extui %0 : i1 to i32
    %c0_i32_0 = arith.constant 0 : i32
    %2 = arith.cmpi ne, %1, %c0_i32_0 : i32
    scf.if %2 {
      %cst_9 = arith.constant 0.000000e+00 : f32
      %12 = vector.broadcast %cst_9 : f32 to vector<8x512xf32>
      %c0_10 = arith.constant 0 : index
      %c0_11 = arith.constant 0 : index
      %13 = vector.load %arg7[%c0_10, %c0_11] : memref<8x512xf32, #tpu.memory_space<vmem>>, vector<8x512xf32>
      tpu.vector_store %arg7[%c0_10, %c0_11], %12 {strides = array<i32>} : memref<8x512xf32, #tpu.memory_space<vmem>>, vector<8x512xf32>,
    } else {
    }
    %c0 = arith.constant 0 : index
    %c0_1 = arith.constant 0 : index
    %3 = vector.load %arg7[%c0, %c0_1] : memref<8x512xf32, #tpu.memory_space<vmem>>, vector<8x512xf32>
    %c0_2 = arith.constant 0 : index
    %c0_3 = arith.constant 0 : index
    %4 = vector.load %arg3[%c0_2, %c0_3] : memref<8x256xbf16, #tpu.memory_space<vmem>>, vector<8x256xbf16>
    %c0_4 = arith.constant 0 : index
    %c0_5 = arith.constant 0 : index
    %5 = vector.load %arg4[%c0_4, %c0_5] : memref<256x512xbf16, #tpu.memory_space<vmem>>, vector<256x512xbf16>
    %cst = arith.constant dense<0.000000e+00> : vector<8x512xf32>
    %6 = tpu.matmul %4, %5, %cst {dimension_numbers = #tpu.dot_dimension_numbers<[1], [0], [0], [1], [0, 0, 1, 1], [], []>} : vector<8x256xbf16>, vector<256x512xbf16>, vector<8x512xf32> -> vector<8x512xf32>
    %7 = arith.addf %3, %6 : vector<8x512xf32>
    %c0_6 = arith.constant 0 : index
    %c0_7 = arith.constant 0 : index
    %8 = vector.load %arg7[%c0_6, %c0_7] : memref<8x512xf32, #tpu.memory_space<vmem>>, vector<8x512xf32>
    tpu.vector_store %arg7[%c0_6, %c0_7], %7 {strides = array<i32>} : memref<8x512xf32, #tpu.memory_space<vmem>>, vector<8x512xf32>,
    %c2_i32 = arith.constant 2 : i32
    %9 = arith.cmpi eq, %arg2, %c2_i32 : i32
    %10 = arith.extui %9 : i1 to i32
    %c0_i32_8 = arith.constant 0 : i32
    %11 = arith.cmpi ne, %10, %c0_i32_8 : i32
    scf.if %11 {
      %c0_9 = arith.constant 0 : index
      %c0_10 = arith.constant 0 : index
      %12 = vector.load %arg7[%c0_9, %c0_10] : memref<8x512xf32, #tpu.memory_space<vmem>>, vector<8x512xf32>
      %c0_11 = arith.constant 0 : index
      %c0_12 = arith.constant 0 : index
      %13 = vector.load %arg5[%c0_11, %c0_12] : memref<1x512xf32, #tpu.memory_space<vmem>>, vector<1x512xf32>
      %14 = vector.broadcast %13 : vector<1x512xf32> to vector<8x512xf32>
      %15 = arith.addf %12, %14 : vector<8x512xf32>
      %c0_13 = arith.constant 0 : index
      %c0_14 = arith.constant 0 : index
      %16 = vector.load %arg6[%c0_13, %c0_14] : memref<8x512xf32, #tpu.memory_space<vmem>>, vector<8x512xf32>
      tpu.vector_store %arg6[%c0_13, %c0_14], %15 {strides = array<i32>} : memref<8x512xf32, #tpu.memory_space<vmem>>, vector<8x512xf32>,
    } else {
    }
    return
  }
  func.func @transform_0(%arg0: i32, %arg1: i32, %arg2: i32) -> (i32, i32) {
    %c0_i32 = arith.constant 0 : i32
    return %arg0, %arg2 : i32, i32
  }
  func.func @transform_1(%arg0: i32, %arg1: i32, %arg2: i32) -> (i32, i32) {
    %c0_i32 = arith.constant 0 : i32
    return %arg2, %arg1 : i32, i32
  }
  func.func @transform_2(%arg0: i32, %arg1: i32, %arg2: i32) -> (i32, i32) {
    %c0_i32 = arith.constant 0 : i32
    %c0_i32_0 = arith.constant 0 : i32
    return %c0_i32, %arg1 : i32, i32
  }
  func.func @transform_3(%arg0: i32, %arg1: i32, %arg2: i32) -> (i32, i32) {
    %c0_i32 = arith.constant 0 : i32
    return %arg0, %arg1 : i32, i32
  }
}

</mosaic_0001>

<llo_original>
// kernel: tpu_custom_call.1
$region0: #{tpu_custom_call.1}
  #allocation0 [shape = 'u32[]', space=smem, size = 0x4, offset = 0x4, fixed_abs, tag = 'smem constant byte address 0x4 - core index']
  #allocation1 [shape = 'u32[144,128]{1,0:T(1,128)}', space=vmem, size = 0x12000, scoped, tag = 'internal scratch']
  #allocation2 [shape = 'f32[8,512]{1,0:T(8,128)}', space=vmem, size = 0x4000, scoped, tag = 'scratch operand']
  %s0 = inlined_call_operand.hbm [shape: bf16[8,768], index: 0, kind: input, shape index: {}]
  %s1 = inlined_call_operand.hbm [shape: bf16[768,512], index: 1, kind: input, shape index: {}]
  %s2 = inlined_call_operand.vmem [shape: f32[1,512], index: 2, kind: input, shape index: {}]
  %s3 = inlined_call_operand.hbm [shape: f32[8,512], index: 3, kind: output, shape index: {}]
  %s4 = sld [smem:[#allocation0]]
  $region61: #{tpu_custom_call.1} parent=0
    _
  %s6 = ssub.s32 1, %s4
  %s7 = scalar_select 0, %s6, %s4
  $region1: #{tpu_custom_call.1} parent=0
    #allocation3 [shape = 'u8[8192]{0}', space=vmem, size = 0x2000, scoped, tag = 'input window, operand 0']
    #allocation4 [shape = 's32[2]{0}', space=sflag, size = 0x8, scoped, tag = 'scoped memory for tpu_custom_call.1']
    #allocation5 [shape = 's32[2]{0}', space=sflag, size = 0x8, scoped, tag = 'scoped memory for tpu_custom_call.1']
    #allocation6 [shape = 'u8[524288]{0}', space=vmem, size = 0x80000, scoped, tag = 'input window, operand 1']
    #allocation7 [shape = 's32[2]{0}', space=sflag, size = 0x8, scoped, tag = 'scoped memory for tpu_custom_call.1']
    #allocation8 [shape = 'u8[16384]{0}', space=vmem, size = 0x4000, scoped, tag = 'output window, operand 0, single buffered']
    %8 = vsyncpa [#allocation4], 0
    %s9 = scalar_lea.sflag [#allocation4], 1
    %10 = vsyncpa %s9, 0
    %11 = vsyncpa [#allocation7], 0
    %s12 = scalar_lea.sflag [#allocation7], 1
    %13 = vsyncpa %s12, 0
    %14 = vsyncpa [#allocation5], 0
    loop: start=0, step=1, limit=5
    $region2: #{tpu_custom_call.1} parent=1 // loop_pre_header
      _
    $region3: #{tpu_custom_call.1} parent=1 // loop_header
      %s16 = sphi 0, %s20
      %p17 = scmp.ge.s32.totalorder %s16, 5
      %s23 = sphi 0, %s42
      %s24 = sphi 0, %s38
      %s25 = sphi 0, %s34
      %s26 = sphi 0, %s23
      %s27 = sphi 0, %s24
      %s28 = sphi 0, %s25
      %s29 = sphi 0, %s26
      %s30 = sphi 0, %s27
      %s31 = sphi 0, %s28
      %s47 = sphi 0, %s49
      %s50 = sphi 0, %s47
      %s51 = sphi 0, %s50
      %s67 = sphi 0, %s51
      %s75 = sphi 0, %s77
      %s78 = sphi 0, %s75
      %s79 = sphi 0, %s78
      %s95 = sphi 0, %s79
      %s101 = sphi 0, %s103
      %s104 = sphi 0, %s101
      %s105 = sphi 0, %s104
      %s121 = sphi 0, %s105
      %s129 = sphi 0, %s131
      %s132 = sphi 0, %s129
      %s133 = sphi 0, %s132
      %s149 = sphi 0, %s133
    $region4: #{tpu_custom_call.1} parent=1 // loop_header_branch
      %19 = sbr.rel (%p17) target = $region8
    $region5: #{tpu_custom_call.1} parent=1 // loop_body
      %s21 = ssub.s32 %s16, 1
      %s22 = ssub.s32 %s16, 2
      %s32 = sadd.s32 1, %s25
      %p33 = scmp.ge.s32.totalorder %s32, 3
      %s34 = scalar_select %p33, 0, %s32
      %s35 = sadd.s32 1, %s24
      %s36 = scalar_select %p33, %s35, %s24
      %p37 = scmp.ge.s32.totalorder %s36, 1
      %s38 = scalar_select %p37, 0, %s36
      %s39 = sadd.s32 1, %s23
      %s40 = scalar_select %p37, %s39, %s23
      %p41 = scmp.ge.s32.totalorder %s40, 1
      %s42 = scalar_select %p41, 0, %s40
      %s43 = ssub.s32 %s23, %s42
      %s44 = ssub.s32 %s25, %s34
      %s45 = sor.u32 %s43, %s44
      %p46 = scmp.eq.s32.totalorder %s45, 0
      %s48 = sadd.s32 %s47, 1
      %s49 = scalar_select %p46, %s47, %s48
      %p52 = pneg %p46
      %p53 = scmp.eq.s32.totalorder %s16, 2
      %p54 = por %p52, %p53
      %p55 = scmp.ne.s32.totalorder %s47, %s50
      %p56 = scmp.eq.s32.totalorder %s16, 0
      %p57 = por %p55, %p56
      %p58 = scmp.ne.s32.totalorder %s47, %s50
      %p59 = scmp.eq.s32.totalorder %s21, 2
      %p60 = por %p58, %p59
      %p61 = scmp.ne.s32.totalorder %s50, %s51
      %p62 = scmp.eq.s32.totalorder %s21, 0
      %p63 = por %p61, %p62
      %p64 = scmp.ne.s32.totalorder %s50, %s51
      %p65 = scmp.eq.s32.totalorder %s22, 2
      %p66 = por %p64, %p65
      %p68 = scmp.ne.s32.totalorder %s51, %s67
      %p69 = scmp.eq.s32.totalorder %s22, 0
      %p70 = por %p68, %p69
      %s71 = ssub.s32 %s25, %s34
      %s72 = ssub.s32 %s24, %s38
      %s73 = sor.u32 %s71, %s72
      %p74 = scmp.eq.s32.totalorder %s73, 0
      %s76 = sadd.s32 %s75, 1
      %s77 = scalar_select %p74, %s75, %s76
      %p80 = pneg %p74
      %p81 = scmp.eq.s32.totalorder %s16, 2
      %p82 = por %p80, %p81
      %p83 = scmp.ne.s32.totalorder %s75, %s78
      %p84 = scmp.eq.s32.totalorder %s16, 0
      %p85 = por %p83, %p84
      %p86 = scmp.ne.s32.totalorder %s75, %s78
      %p87 = scmp.eq.s32.totalorder %s21, 2
      %p88 = por %p86, %p87
      %p89 = scmp.ne.s32.totalorder %s78, %s79
      %p90 = scmp.eq.s32.totalorder %s21, 0
      %p91 = por %p89, %p90
      %p92 = scmp.ne.s32.totalorder %s78, %s79
      %p93 = scmp.eq.s32.totalorder %s22, 2
      %p94 = por %p92, %p93
      %p96 = scmp.ne.s32.totalorder %s79, %s95
      %p97 = scmp.eq.s32.totalorder %s22, 0
      %p98 = por %p96, %p97
      %s99 = ssub.s32 %s24, %s38
      %p100 = scmp.eq.s32.totalorder %s99, 0
      %s102 = sadd.s32 %s101, 1
      %s103 = scalar_select %p100, %s101, %s102
      %p106 = pneg %p100
      %p107 = scmp.eq.s32.totalorder %s16, 2
      %p108 = por %p106, %p107
      %p109 = scmp.ne.s32.totalorder %s101, %s104
      %p110 = scmp.eq.s32.totalorder %s16, 0
      %p111 = por %p109, %p110
      %p112 = scmp.ne.s32.totalorder %s101, %s104
      %p113 = scmp.eq.s32.totalorder %s21, 2
      %p114 = por %p112, %p113
      %p115 = scmp.ne.s32.totalorder %s104, %s105
      %p116 = scmp.eq.s32.totalorder %s21, 0
      %p117 = por %p115, %p116
      %p118 = scmp.ne.s32.totalorder %s104, %s105
      %p119 = scmp.eq.s32.totalorder %s22, 2
      %p120 = por %p118, %p119
      %p122 = scmp.ne.s32.totalorder %s105, %s121
      %p123 = scmp.eq.s32.totalorder %s22, 0
      %p124 = por %p122, %p123
      %s125 = ssub.s32 %s23, %s42
      %s126 = ssub.s32 %s24, %s38
      %s127 = sor.u32 %s125, %s126
      %p128 = scmp.eq.s32.totalorder %s127, 0
      %s130 = sadd.s32 %s129, 1
      %s131 = scalar_select %p128, %s129, %s130
      %p134 = pneg %p128
      %p135 = scmp.eq.s32.totalorder %s16, 2
      %p136 = por %p134, %p135
      %p137 = scmp.ne.s32.totalorder %s129, %s132
      %p138 = scmp.eq.s32.totalorder %s16, 0
      %p139 = por %p137, %p138
      %p140 = scmp.ne.s32.totalorder %s129, %s132
      %p141 = scmp.eq.s32.totalorder %s21, 2
      %p142 = por %p140, %p141
      %p143 = scmp.ne.s32.totalorder %s132, %s133
      %p144 = scmp.eq.s32.totalorder %s21, 0
      %p145 = por %p143, %p144
      %p146 = scmp.ne.s32.totalorder %s132, %s133
      %p147 = scmp.eq.s32.totalorder %s22, 2
      %p148 = por %p146, %p147
      %p150 = scmp.ne.s32.totalorder %s133, %s149
      %p151 = scmp.eq.s32.totalorder %s22, 0
      %p152 = por %p150, %p151
      %p153 = scmp.le.s32.totalorder 1, %s16
      %p154 = scmp.lt.s32.totalorder %s16, 4
      %p155 = pnand %p153, %p154
      %p156 = pneg %p155
      // Predicated region
      $region9: #{tpu_custom_call.1} parent=5 // pred_check
        _
      $region10: #{tpu_custom_call.1} parent=5 // pred_check_branch
        %158 = sbr.rel (%p155) target = $region12
      $region11: #{tpu_custom_call.1} parent=5 // pred_region
        %s159 = ssub.s32 %s16, 1
        // Predicated region
        $region13: #{tpu_custom_call.1} parent=11 // pred_check
          %p160 = pneg %p117
        $region14: #{tpu_custom_call.1} parent=11 // pred_check_branch
          %162 = sbr.rel (%p160) target = $region16
        $region15: #{tpu_custom_call.1} parent=11 // pred_region
          %s163 = smul.u32 4, %s27
          %p164 = scmp.lt.s32.totalorder %s163, 3
          %s165 = scalar_select %p164, %s163, 3
          %s166 = scalar_lea.vmem %s2, %s165
          %s167 = smul.u32 4, %s27
        $region16: #{tpu_custom_call.1} parent=11 // pred_fallthru
          _
      $region12: #{tpu_custom_call.1} parent=5 // pred_fallthru
        _
      %p168 = scmp.lt.s32.totalorder %s16, 3
      // Predicated region
      $region17: #{tpu_custom_call.1} parent=5 // pred_check
        %p169 = pneg %p168
      $region18: #{tpu_custom_call.1} parent=5 // pred_check_branch
        %171 = sbr.rel (%p169) target = $region20
      $region19: #{tpu_custom_call.1} parent=5 // pred_region
        // Predicated region
        $region21: #{tpu_custom_call.1} parent=19 // pred_check
          %p172 = pneg %p57
        $region22: #{tpu_custom_call.1} parent=19 // pred_check_branch
          %174 = sbr.rel (%p172) target = $region24
        $region23: #{tpu_custom_call.1} parent=19 // pred_region
          %s175 = sand.u32 %s47, 1
          %s176 = scalar_lea.sflag [#allocation4], %s175
          %s177 = sand.u32 %s47, 1
          %s178 = smul.addr %s177, 8
          %s179 = scalar_lea.vmem [#allocation3], %s178
          %s180 = smul.u32 2, %s25
          %s182 = ssub.s32 128, 128
          %183 = vsyncadd %s176, %s182
          %s184 = smul.addr %s23, 6
          %s185 = sadd.s32 %s180, %s184
          %s186 = smul.addr %s185, 64
          %s187 = scalar_lea.hbm %s0, %s186
          %s189 = sshll.u32 %s179, 4
          %s190 = int_to_ptr.vmem [resolvable:$true] %s189
          %192 = dma.hbm_to_vmem [thread:$0]  %s187, 128, %s190, %s176
        $region24: #{tpu_custom_call.1} parent=19 // pred_fallthru
          _
        // Predicated region
        $region25: #{tpu_custom_call.1} parent=19 // pred_check
          %p193 = pneg %p85
        $region26: #{tpu_custom_call.1} parent=19 // pred_check_branch
          %195 = sbr.rel (%p193) target = $region28
        $region27: #{tpu_custom_call.1} parent=19 // pred_region
          %s196 = sand.u32 %s75, 1
          %s197 = scalar_lea.sflag [#allocation7], %s196
          %s198 = sand.u32 %s75, 1
          %s199 = smul.addr %s198, 512
          %s200 = scalar_lea.vmem [#allocation6], %s199
          %s201 = smul.u32 32, %s25
          %s202 = smul.u32 4, %s24
          %s204 = ssub.s32 8192, 8192
          %205 = vsyncadd %s197, %s204
          %s206 = smul.addr %s201, 4
          %s207 = sadd.s32 %s202, %s206
          %s208 = smul.addr %s207, 64
          %s209 = scalar_lea.hbm %s1, %s208
          %s210 = sshll.u32 %s200, 4
          %s211 = int_to_ptr.vmem [resolvable:$true] %s210
          %216 = dma.hbm_to_vmem [thread:$0]  %s209, 8192, %s211, %s197, 256, 256, 16
        $region28: #{tpu_custom_call.1} parent=19 // pred_fallthru
          _
      $region20: #{tpu_custom_call.1} parent=5 // pred_fallthru
        _
      %p217 = scmp.le.s32.totalorder 1, %s16
      %p218 = scmp.lt.s32.totalorder %s16, 4
      %p219 = pnand %p217, %p218
      %p220 = pneg %p219
      // Predicated region
      $region29: #{tpu_custom_call.1} parent=5 // pred_check
        _
      $region30: #{tpu_custom_call.1} parent=5 // pred_check_branch
        %222 = sbr.rel (%p219) target = $region32
      $region31: #{tpu_custom_call.1} parent=5 // pred_region
        %s223 = ssub.s32 %s16, 1
        %s224 = sand.u32 %s50, 1
        %s225 = scalar_lea.sflag [#allocation4], %s224
        %s226 = sand.u32 %s50, 1
        %s227 = smul.addr %s226, 8
        %s228 = scalar_lea.vmem [#allocation3], %s227
        // Predicated region
        $region33: #{tpu_custom_call.1} parent=31 // pred_check
          %p229 = pneg %p63
        $region34: #{tpu_custom_call.1} parent=31 // pred_check_branch
          %231 = sbr.rel (%p229) target = $region36
        $region35: #{tpu_custom_call.1} parent=31 // pred_region
          %232 = dma.done %s225, 128
        $region36: #{tpu_custom_call.1} parent=31 // pred_fallthru
          _
        %s233 = sand.u32 %s78, 1
        %s234 = scalar_lea.sflag [#allocation7], %s233
        %s235 = sand.u32 %s78, 1
        %s236 = smul.addr %s235, 512
        %s237 = scalar_lea.vmem [#allocation6], %s236
        // Predicated region
        $region37: #{tpu_custom_call.1} parent=31 // pred_check
          %p238 = pneg %p91
        $region38: #{tpu_custom_call.1} parent=31 // pred_check_branch
          %240 = sbr.rel (%p238) target = $region40
        $region39: #{tpu_custom_call.1} parent=31 // pred_region
          %241 = dma.done %s234, 8192
        $region40: #{tpu_custom_call.1} parent=31 // pred_fallthru
          _
        %s242 = sand.u32 %s50, 1
        %s243 = scalar_lea.sflag [#allocation4], %s242
        %s244 = sand.u32 %s50, 1
        %s245 = smul.addr %s244, 8
        %s246 = scalar_lea.vmem [#allocation3], %s245
        %p247 = pneg %p63
        %p248 = pneg %p60
        %s249 = sand.u32 %s78, 1
        %s250 = scalar_lea.sflag [#allocation7], %s249
        %s251 = sand.u32 %s78, 1
        %s252 = smul.addr %s251, 512
        %s253 = scalar_lea.vmem [#allocation6], %s252
        %p254 = pneg %p91
        %p255 = pneg %p88
        %s256 = smul.u32 4, %s27
        %p257 = scmp.lt.s32.totalorder %s256, 3
        %s258 = scalar_select %p257, %s256, 3
        %s259 = scalar_lea.vmem %s2, %s258
        %p260 = pneg %p117
        %p261 = pneg %p114
        %p262 = pneg %p145
        %p263 = pneg %p142
        %s264 = smul.u32 2, %s28
        %s265 = smul.u32 32, %s28
        %s266 = smul.u32 4, %s27
        %s267 = smul.u32 4, %s27
        %p268 = scmp.lt.s32.totalorder %s267, 3
        %s269 = scalar_select %p268, %s267, 3
        %s270 = scalar_lea.vmem %s2, %s269
        %s271 = smul.u32 4, %s27
        %s272 = smul.u32 4, %s27
        %p273 = scmp.eq.s32.totalorder %s28, 0
        // Predicated region
        $region41: #{tpu_custom_call.1} parent=31 // pred_check
          %p274 = pneg %p273
        $region42: #{tpu_custom_call.1} parent=31 // pred_check_branch
          %276 = sbr.rel (%p274) target = $region44
        $region43: #{tpu_custom_call.1} parent=31 // pred_region
          %277 = vst [vmem:[#allocation2] sm:$0xff] 0.0
          %278 = vst [vmem:[#allocation2 + $0x8] sm:$0xff] 0.0
          %279 = vst [vmem:[#allocation2 + $0x10] sm:$0xff] 0.0
          %280 = vst [vmem:[#allocation2 + $0x18] sm:$0xff] 0.0
        $region44: #{tpu_custom_call.1} parent=31 // pred_fallthru
          _
        %v281 = vld [vmem:[#allocation2] sm:$0xff]
        %v282 = vld [vmem:[#allocation2 + $0x8] sm:$0xff]
        %v283 = vld [vmem:[#allocation2 + $0x10] sm:$0xff]
        %v284 = vld [vmem:[#allocation2 + $0x18] sm:$0xff]
        %v285 = vld [vmem:[%s228] sm:$0xff]
        %v286 = vld [vmem:[%s237] sm:$0xff]
        %v287 = vld [vmem:[%s237 + $0x8] sm:$0xff]
        %v288 = vld [vmem:[%s237 + $0x10] sm:$0xff]
        %v289 = vld [vmem:[%s237 + $0x18] sm:$0xff]
        %v290 = vld [vmem:[%s237 + $0x20] sm:$0xff]
        %v291 = vld [vmem:[%s237 + $0x28] sm:$0xff]
        %v292 = vld [vmem:[%s237 + $0x30] sm:$0xff]
        %v293 = vld [vmem:[%s237 + $0x38] sm:$0xff]
        %v294 = vld [vmem:[%s237 + $0x40] sm:$0xff]
        %v295 = vld [vmem:[%s237 + $0x48] sm:$0xff]
        %v296 = vld [vmem:[%s237 + $0x50] sm:$0xff]
        %v297 = vld [vmem:[%s237 + $0x58] sm:$0xff]
        %v298 = vld [vmem:[%s237 + $0x60] sm:$0xff]
        %v299 = vld [vmem:[%s237 + $0x68] sm:$0xff]
        %v300 = vld [vmem:[%s237 + $0x70] sm:$0xff]
        %v301 = vld [vmem:[%s237 + $0x78] sm:$0xff]
        %v302 = vld [vmem:[%s237 + $0x80] sm:$0xff]
        %v303 = vld [vmem:[%s237 + $0x88] sm:$0xff]
        %v304 = vld [vmem:[%s237 + $0x90] sm:$0xff]
        %v305 = vld [vmem:[%s237 + $0x98] sm:$0xff]
        %v306 = vld [vmem:[%s237 + $0xa0] sm:$0xff]
        %v307 = vld [vmem:[%s237 + $0xa8] sm:$0xff]
        %v308 = vld [vmem:[%s237 + $0xb0] sm:$0xff]
        %v309 = vld [vmem:[%s237 + $0xb8] sm:$0xff]
        %v310 = vld [vmem:[%s237 + $0xc0] sm:$0xff]
        %v311 = vld [vmem:[%s237 + $0xc8] sm:$0xff]
        %v312 = vld [vmem:[%s237 + $0xd0] sm:$0xff]
        %v313 = vld [vmem:[%s237 + $0xd8] sm:$0xff]
        %v314 = vld [vmem:[%s237 + $0xe0] sm:$0xff]
        %v315 = vld [vmem:[%s237 + $0xe8] sm:$0xff]
        %v316 = vld [vmem:[%s237 + $0xf0] sm:$0xff]
        %v317 = vld [vmem:[%s237 + $0xf8] sm:$0xff]
        %v318 = vld [vmem:[%s237 + $0x100] sm:$0xff]
        %v319 = vld [vmem:[%s237 + $0x108] sm:$0xff]
        %v320 = vld [vmem:[%s237 + $0x110] sm:$0xff]
        %v321 = vld [vmem:[%s237 + $0x118] sm:$0xff]
        %v322 = vld [vmem:[%s237 + $0x120] sm:$0xff]
        %v323 = vld [vmem:[%s237 + $0x128] sm:$0xff]
        %v324 = vld [vmem:[%s237 + $0x130] sm:$0xff]
        %v325 = vld [vmem:[%s237 + $0x138] sm:$0xff]
        %v326 = vld [vmem:[%s237 + $0x140] sm:$0xff]
        %v327 = vld [vmem:[%s237 + $0x148] sm:$0xff]
        %v328 = vld [vmem:[%s237 + $0x150] sm:$0xff]
        %v329 = vld [vmem:[%s237 + $0x158] sm:$0xff]
        %v330 = vld [vmem:[%s237 + $0x160] sm:$0xff]
        %v331 = vld [vmem:[%s237 + $0x168] sm:$0xff]
        %v332 = vld [vmem:[%s237 + $0x170] sm:$0xff]
        %v333 = vld [vmem:[%s237 + $0x178] sm:$0xff]
        %v334 = vld [vmem:[%s237 + $0x180] sm:$0xff]
        %v335 = vld [vmem:[%s237 + $0x188] sm:$0xff]
        %v336 = vld [vmem:[%s237 + $0x190] sm:$0xff]
        %v337 = vld [vmem:[%s237 + $0x198] sm:$0xff]
        %v338 = vld [vmem:[%s237 + $0x1a0] sm:$0xff]
        %v339 = vld [vmem:[%s237 + $0x1a8] sm:$0xff]
        %v340 = vld [vmem:[%s237 + $0x1b0] sm:$0xff]
        %v341 = vld [vmem:[%s237 + $0x1b8] sm:$0xff]
        %v342 = vld [vmem:[%s237 + $0x1c0] sm:$0xff]
        %v343 = vld [vmem:[%s237 + $0x1c8] sm:$0xff]
        %v344 = vld [vmem:[%s237 + $0x1d0] sm:$0xff]
        %v345 = vld [vmem:[%s237 + $0x1d8] sm:$0xff]
        %v346 = vld [vmem:[%s237 + $0x1e0] sm:$0xff]
        %v347 = vld [vmem:[%s237 + $0x1e8] sm:$0xff]
        %v348 = vld [vmem:[%s237 + $0x1f0] sm:$0xff]
        %v349 = vld [vmem:[%s237 + $0x1f8] sm:$0xff]
        %v351 = vunpack.c.l.b16 %v285
        %v352 = vunpack.c.h.b16 %v285
        %v353 = vpack.c.b16 %v351, %v351
        %v354 = vpack.c.b16 %v352, %v352
        %v421 = vunpack.c.l.b16 %v286
        %v422 = vunpack.c.h.b16 %v286
        %v423 = vunpack.c.l.b16 %v287
        %v424 = vunpack.c.h.b16 %v287
        %v425 = vunpack.c.l.b16 %v288
        %v426 = vunpack.c.h.b16 %v288
        %v427 = vunpack.c.l.b16 %v289
        %v428 = vunpack.c.h.b16 %v289
        %v429 = vunpack.c.l.b16 %v290
        %v430 = vunpack.c.h.b16 %v290
        %v431 = vunpack.c.l.b16 %v291
        %v432 = vunpack.c.h.b16 %v291
        %v433 = vunpack.c.l.b16 %v292
        %v434 = vunpack.c.h.b16 %v292
        %v435 = vunpack.c.l.b16 %v293
        %v436 = vunpack.c.h.b16 %v293
        %v437 = vunpack.c.l.b16 %v294
        %v438 = vunpack.c.h.b16 %v294
        %v439 = vunpack.c.l.b16 %v295
        %v440 = vunpack.c.h.b16 %v295
        %v441 = vunpack.c.l.b16 %v296
        %v442 = vunpack.c.h.b16 %v296
        %v443 = vunpack.c.l.b16 %v297
        %v444 = vunpack.c.h.b16 %v297
        %v445 = vunpack.c.l.b16 %v298
        %v446 = vunpack.c.h.b16 %v298
        %v447 = vunpack.c.l.b16 %v299
        %v448 = vunpack.c.h.b16 %v299
        %v449 = vunpack.c.l.b16 %v300
        %v450 = vunpack.c.h.b16 %v300
        %v451 = vunpack.c.l.b16 %v301
        %v452 = vunpack.c.h.b16 %v301
        %v453 = vunpack.c.l.b16 %v302
        %v454 = vunpack.c.h.b16 %v302
        %v455 = vunpack.c.l.b16 %v303
        %v456 = vunpack.c.h.b16 %v303
        %v457 = vunpack.c.l.b16 %v304
        %v458 = vunpack.c.h.b16 %v304
        %v459 = vunpack.c.l.b16 %v305
        %v460 = vunpack.c.h.b16 %v305
        %v461 = vunpack.c.l.b16 %v306
        %v462 = vunpack.c.h.b16 %v306
        %v463 = vunpack.c.l.b16 %v307
        %v464 = vunpack.c.h.b16 %v307
        %v465 = vunpack.c.l.b16 %v308
        %v466 = vunpack.c.h.b16 %v308
        %v467 = vunpack.c.l.b16 %v309
        %v468 = vunpack.c.h.b16 %v309
        %v469 = vunpack.c.l.b16 %v310
        %v470 = vunpack.c.h.b16 %v310
        %v471 = vunpack.c.l.b16 %v311
        %v472 = vunpack.c.h.b16 %v311
        %v473 = vunpack.c.l.b16 %v312
        %v474 = vunpack.c.h.b16 %v312
        %v475 = vunpack.c.l.b16 %v313
        %v476 = vunpack.c.h.b16 %v313
        %v477 = vunpack.c.l.b16 %v314
        %v478 = vunpack.c.h.b16 %v314
        %v479 = vunpack.c.l.b16 %v315
        %v480 = vunpack.c.h.b16 %v315
        %v481 = vunpack.c.l.b16 %v316
        %v482 = vunpack.c.h.b16 %v316
        %v483 = vunpack.c.l.b16 %v317
        %v484 = vunpack.c.h.b16 %v317
        %v485 = vunpack.c.l.b16 %v318
        %v486 = vunpack.c.h.b16 %v318
        %v487 = vunpack.c.l.b16 %v319
        %v488 = vunpack.c.h.b16 %v319
        %v489 = vunpack.c.l.b16 %v320
        %v490 = vunpack.c.h.b16 %v320
        %v491 = vunpack.c.l.b16 %v321
        %v492 = vunpack.c.h.b16 %v321
        %v493 = vunpack.c.l.b16 %v322
        %v494 = vunpack.c.h.b16 %v322
        %v495 = vunpack.c.l.b16 %v323
        %v496 = vunpack.c.h.b16 %v323
        %v497 = vunpack.c.l.b16 %v324
        %v498 = vunpack.c.h.b16 %v324
        %v499 = vunpack.c.l.b16 %v325
        %v500 = vunpack.c.h.b16 %v325
        %v501 = vunpack.c.l.b16 %v326
        %v502 = vunpack.c.h.b16 %v326
        %v503 = vunpack.c.l.b16 %v327
        %v504 = vunpack.c.h.b16 %v327
        %v505 = vunpack.c.l.b16 %v328
        %v506 = vunpack.c.h.b16 %v328
        %v507 = vunpack.c.l.b16 %v329
        %v508 = vunpack.c.h.b16 %v329
        %v509 = vunpack.c.l.b16 %v330
        %v510 = vunpack.c.h.b16 %v330
        %v511 = vunpack.c.l.b16 %v331
        %v512 = vunpack.c.h.b16 %v331
        %v513 = vunpack.c.l.b16 %v332
        %v514 = vunpack.c.h.b16 %v332
        %v515 = vunpack.c.l.b16 %v333
        %v516 = vunpack.c.h.b16 %v333
        %v517 = vunpack.c.l.b16 %v334
        %v518 = vunpack.c.h.b16 %v334
        %v519 = vunpack.c.l.b16 %v335
        %v520 = vunpack.c.h.b16 %v335
        %v521 = vunpack.c.l.b16 %v336
        %v522 = vunpack.c.h.b16 %v336
        %v523 = vunpack.c.l.b16 %v337
        %v524 = vunpack.c.h.b16 %v337
        %v525 = vunpack.c.l.b16 %v338
        %v526 = vunpack.c.h.b16 %v338
        %v527 = vunpack.c.l.b16 %v339
        %v528 = vunpack.c.h.b16 %v339
        %v529 = vunpack.c.l.b16 %v340
        %v530 = vunpack.c.h.b16 %v340
        %v531 = vunpack.c.l.b16 %v341
        %v532 = vunpack.c.h.b16 %v341
        %v533 = vunpack.c.l.b16 %v342
        %v534 = vunpack.c.h.b16 %v342
        %v535 = vunpack.c.l.b16 %v343
        %v536 = vunpack.c.h.b16 %v343
        %v537 = vunpack.c.l.b16 %v344
        %v538 = vunpack.c.h.b16 %v344
        %v539 = vunpack.c.l.b16 %v345
        %v540 = vunpack.c.h.b16 %v345
        %v541 = vunpack.c.l.b16 %v346
        %v542 = vunpack.c.h.b16 %v346
        %v543 = vunpack.c.l.b16 %v347
        %v544 = vunpack.c.h.b16 %v347
        %v545 = vunpack.c.l.b16 %v348
        %v546 = vunpack.c.h.b16 %v348
        %v547 = vunpack.c.l.b16 %v349
        %v548 = vunpack.c.h.b16 %v349
        %v549 = vpack.c.b16 %v425, %v421
        %v550 = vpack.c.b16 %v426, %v422
        %v551 = vpack.c.b16 %v427, %v423
        %v552 = vpack.c.b16 %v428, %v424
        %v553 = vpack.c.b16 %v433, %v429
        %v554 = vpack.c.b16 %v434, %v430
        %v555 = vpack.c.b16 %v435, %v431
        %v556 = vpack.c.b16 %v436, %v432
        %v557 = vpack.c.b16 %v441, %v437
        %v558 = vpack.c.b16 %v442, %v438
        %v559 = vpack.c.b16 %v443, %v439
        %v560 = vpack.c.b16 %v444, %v440
        %v561 = vpack.c.b16 %v449, %v445
        %v562 = vpack.c.b16 %v450, %v446
        %v563 = vpack.c.b16 %v451, %v447
        %v564 = vpack.c.b16 %v452, %v448
        %v565 = vpack.c.b16 %v457, %v453
        %v566 = vpack.c.b16 %v458, %v454
        %v567 = vpack.c.b16 %v459, %v455
        %v568 = vpack.c.b16 %v460, %v456
        %v569 = vpack.c.b16 %v465, %v461
        %v570 = vpack.c.b16 %v466, %v462
        %v571 = vpack.c.b16 %v467, %v463
        %v572 = vpack.c.b16 %v468, %v464
        %v573 = vpack.c.b16 %v473, %v469
        %v574 = vpack.c.b16 %v474, %v470
        %v575 = vpack.c.b16 %v475, %v471
        %v576 = vpack.c.b16 %v476, %v472
        %v577 = vpack.c.b16 %v481, %v477
        %v578 = vpack.c.b16 %v482, %v478
        %v579 = vpack.c.b16 %v483, %v479
        %v580 = vpack.c.b16 %v484, %v480
        %v581 = vpack.c.b16 %v489, %v485
        %v582 = vpack.c.b16 %v490, %v486
        %v583 = vpack.c.b16 %v491, %v487
        %v584 = vpack.c.b16 %v492, %v488
        %v585 = vpack.c.b16 %v497, %v493
        %v586 = vpack.c.b16 %v498, %v494
        %v587 = vpack.c.b16 %v499, %v495
        %v588 = vpack.c.b16 %v500, %v496
        %v589 = vpack.c.b16 %v505, %v501
        %v590 = vpack.c.b16 %v506, %v502
        %v591 = vpack.c.b16 %v507, %v503
        %v592 = vpack.c.b16 %v508, %v504
        %v593 = vpack.c.b16 %v513, %v509
        %v594 = vpack.c.b16 %v514, %v510
        %v595 = vpack.c.b16 %v515, %v511
        %v596 = vpack.c.b16 %v516, %v512
        %v597 = vpack.c.b16 %v521, %v517
        %v598 = vpack.c.b16 %v522, %v518
        %v599 = vpack.c.b16 %v523, %v519
        %v600 = vpack.c.b16 %v524, %v520
        %v601 = vpack.c.b16 %v529, %v525
        %v602 = vpack.c.b16 %v530, %v526
        %v603 = vpack.c.b16 %v531, %v527
        %v604 = vpack.c.b16 %v532, %v528
        %v605 = vpack.c.b16 %v537, %v533
        %v606 = vpack.c.b16 %v538, %v534
        %v607 = vpack.c.b16 %v539, %v535
        %v608 = vpack.c.b16 %v540, %v536
        %v609 = vpack.c.b16 %v545, %v541
        %v610 = vpack.c.b16 %v546, %v542
        %v611 = vpack.c.b16 %v547, %v543
        %v612 = vpack.c.b16 %v548, %v544
        %677 = vmatprep.subr.bf16.mxu0 %v550
        %678 = vmatpush1.bf16.msra.mxu0 %v549
        %679 = vmatprep.subr.bf16.mxu0 %v554
        %680 = vmatpush1.bf16.msra.mxu0 %v553
        %681 = vmatprep.subr.bf16.mxu0 %v558
        %682 = vmatpush1.bf16.msra.mxu0 %v557
        %683 = vmatprep.subr.bf16.mxu0 %v562
        %684 = vmatpush1.bf16.msra.mxu0 %v561
        %685 = vmatprep.subr.bf16.mxu0 %v566
        %686 = vmatpush1.bf16.msra.mxu0 %v565
        %687 = vmatprep.subr.bf16.mxu0 %v570
        %688 = vmatpush1.bf16.msra.mxu0 %v569
        %689 = vmatprep.subr.bf16.mxu0 %v574
        %690 = vmatpush1.bf16.msra.mxu0 %v573
        %691 = vmatprep.subr.bf16.mxu0 %v578
        %692 = vmatpush1.bf16.msra.mxu0 %v577
        %693 = vmatprep.subr.bf16.mxu0 %v582
        %694 = vmatpush1.bf16.msra.mxu0 %v581
        %695 = vmatprep.subr.bf16.mxu0 %v586
        %696 = vmatpush1.bf16.msra.mxu0 %v585
        %697 = vmatprep.subr.bf16.mxu0 %v590
        %698 = vmatpush1.bf16.msra.mxu0 %v589
        %699 = vmatprep.subr.bf16.mxu0 %v594
        %700 = vmatpush1.bf16.msra.mxu0 %v593
        %701 = vmatprep.subr.bf16.mxu0 %v598
        %702 = vmatpush1.bf16.msra.mxu0 %v597
        %703 = vmatprep.subr.bf16.mxu0 %v602
        %704 = vmatpush1.bf16.msra.mxu0 %v601
        %705 = vmatprep.subr.bf16.mxu0 %v606
        %706 = vmatpush1.bf16.msra.mxu0 %v605
        %707 = vmatprep.subr.bf16.mxu0 %v610
        %708 = vmatpush1.bf16.msra.mxu0 %v609
        %709 = vmatprep.mubr.bf16.mxu0 %v354
        %710 = vmatmul.mubr.bf16.gmra.mrb[0].mxu0 %v353
        %v711 = vpop.f32.mrb[0].mxu0
        %v712 = vadd.f32 0.0, %v711
        %v713 = vpop.f32.mrb[0].mxu0
        %v714 = vadd.f32 0.0, %v713
        %v715 = vpop.f32.mrb[0].mxu0
        %v716 = vpop.f32.mrb[0].mxu0
        %717 = vdwg.mxu0
        %718 = vmatprep.subr.bf16.mxu0 %v552
        %719 = vmatpush1.bf16.msra.mxu0 %v551
        %720 = vmatprep.subr.bf16.mxu0 %v556
        %721 = vmatpush1.bf16.msra.mxu0 %v555
        %722 = vmatprep.subr.bf16.mxu0 %v560
        %723 = vmatpush1.bf16.msra.mxu0 %v559
        %724 = vmatprep.subr.bf16.mxu0 %v564
        %725 = vmatpush1.bf16.msra.mxu0 %v563
        %726 = vmatprep.subr.bf16.mxu0 %v568
        %727 = vmatpush1.bf16.msra.mxu0 %v567
        %728 = vmatprep.subr.bf16.mxu0 %v572
        %729 = vmatpush1.bf16.msra.mxu0 %v571
        %730 = vmatprep.subr.bf16.mxu0 %v576
        %731 = vmatpush1.bf16.msra.mxu0 %v575
        %732 = vmatprep.subr.bf16.mxu0 %v580
        %733 = vmatpush1.bf16.msra.mxu0 %v579
        %734 = vmatprep.subr.bf16.mxu0 %v584
        %735 = vmatpush1.bf16.msra.mxu0 %v583
        %736 = vmatprep.subr.bf16.mxu0 %v588
        %737 = vmatpush1.bf16.msra.mxu0 %v587
        %738 = vmatprep.subr.bf16.mxu0 %v592
        %739 = vmatpush1.bf16.msra.mxu0 %v591
        %740 = vmatprep.subr.bf16.mxu0 %v596
        %741 = vmatpush1.bf16.msra.mxu0 %v595
        %742 = vmatprep.subr.bf16.mxu0 %v600
        %743 = vmatpush1.bf16.msra.mxu0 %v599
        %744 = vmatprep.subr.bf16.mxu0 %v604
        %745 = vmatpush1.bf16.msra.mxu0 %v603
        %746 = vmatprep.subr.bf16.mxu0 %v608
        %747 = vmatpush1.bf16.msra.mxu0 %v607
        %748 = vmatprep.subr.bf16.mxu0 %v612
        %749 = vmatpush1.bf16.msra.mxu0 %v611
        %750 = vmatprep.mubr.bf16.mxu0 %v354
        %751 = vmatmul.mubr.bf16.gmra.mrb[0].mxu0 %v353
        %v752 = vpop.f32.mrb[0].mxu0
        %v753 = vadd.f32 0.0, %v752
        %v754 = vpop.f32.mrb[0].mxu0
        %v755 = vadd.f32 0.0, %v754
        %v756 = vpop.f32.mrb[0].mxu0
        %v757 = vpop.f32.mrb[0].mxu0
        %758 = vdwg.mxu0
        %v759 = vadd.f32 %v281, %v712
        %v760 = vadd.f32 %v282, %v714
        %v761 = vadd.f32 %v283, %v753
        %v762 = vadd.f32 %v284, %v755
        %763 = vst [vmem:[#allocation2] sm:$0xff] %v759
        %764 = vst [vmem:[#allocation2 + $0x8] sm:$0xff] %v760
        %765 = vst [vmem:[#allocation2 + $0x10] sm:$0xff] %v761
        %766 = vst [vmem:[#allocation2 + $0x18] sm:$0xff] %v762
        %p767 = scmp.eq.s32.totalorder %s28, 2
        // Predicated region
        $region45: #{tpu_custom_call.1} parent=31 // pred_check
          %p768 = pneg %p767
        $region46: #{tpu_custom_call.1} parent=31 // pred_check_branch
          %770 = sbr.rel (%p768) target = $region48
        $region47: #{tpu_custom_call.1} parent=31 // pred_region
          %v771 = vld [vmem:[#allocation2] sm:$0xff]
          %v772 = vld [vmem:[#allocation2 + $0x8] sm:$0xff]
          %v773 = vld [vmem:[#allocation2 + $0x10] sm:$0xff]
          %v774 = vld [vmem:[#allocation2 + $0x18] sm:$0xff]
          %v775 = vld [vmem:[%s270] sm:$0xf]
          %v777 = vlaneseq
          %v778 = vshrl.u32 %v777, 7
          %v779 = vsub.s32 0, %v778
          %v780 = vrot.slane %v775, %v779
          %v781 = vlaneseq
          %v782 = vshrl.u32 %v781, 7
          %v783 = vsub.s32 1, %v782
          %v784 = vrot.slane %v775, %v783
          %v785 = vlaneseq
          %v786 = vshrl.u32 %v785, 7
          %v787 = vsub.s32 2, %v786
          %v788 = vrot.slane %v775, %v787
          %v789 = vlaneseq
          %v790 = vshrl.u32 %v789, 7
          %v791 = vsub.s32 3, %v790
          %v792 = vrot.slane %v775, %v791
          %v797 = vadd.f32 %v771, %v780
          %v798 = vadd.f32 %v772, %v784
          %v799 = vadd.f32 %v773, %v788
          %v800 = vadd.f32 %v774, %v792
          %801 = vst [vmem:[#allocation8] sm:$0xff] %v797
          %802 = vst [vmem:[#allocation8 + $0x8] sm:$0xff] %v798
          %803 = vst [vmem:[#allocation8 + $0x10] sm:$0xff] %v799
          %804 = vst [vmem:[#allocation8 + $0x18] sm:$0xff] %v800
        $region48: #{tpu_custom_call.1} parent=31 // pred_fallthru
          _
        // Predicated region
        $region49: #{tpu_custom_call.1} parent=31 // pred_check
          %p805 = pneg %p142
        $region50: #{tpu_custom_call.1} parent=31 // pred_check_branch
          %807 = sbr.rel (%p805) target = $region52
        $region51: #{tpu_custom_call.1} parent=31 // pred_region
          %s808 = smul.u32 4, %s27
          %s810 = ssub.s32 512, 512
          %811 = vsyncadd [#allocation5], %s810
          %s812 = smul.addr %s26, 4
          %s813 = sadd.s32 %s808, %s812
          %s814 = smul.addr %s813, 128
          %s815 = scalar_lea.hbm %s3, %s814
          %s817 = sshll.u32 [#allocation8], 4
          %s818 = int_to_ptr.vmem [resolvable:$true] %s817
          %820 = dma.vmem_to_hbm [thread:$0]  %s818, 512, %s815, [#allocation5]
        $region52: #{tpu_custom_call.1} parent=31 // pred_fallthru
          _
        // Predicated region
        $region53: #{tpu_custom_call.1} parent=31 // pred_check
          %p821 = pneg %p142
        $region54: #{tpu_custom_call.1} parent=31 // pred_check_branch
          %823 = sbr.rel (%p821) target = $region56
        $region55: #{tpu_custom_call.1} parent=31 // pred_region
          %824 = dma.done [#allocation5], 512
        $region56: #{tpu_custom_call.1} parent=31 // pred_fallthru
          _
      $region32: #{tpu_custom_call.1} parent=5 // pred_fallthru
        _
      %p825 = scmp.le.s32.totalorder 2, %s16
      // Predicated region
      $region57: #{tpu_custom_call.1} parent=5 // pred_check
        %p826 = pneg %p825
      $region58: #{tpu_custom_call.1} parent=5 // pred_check_branch
        %828 = sbr.rel (%p826) target = $region60
      $region59: #{tpu_custom_call.1} parent=5 // pred_region
        %s829 = ssub.s32 %s16, 2
      $region60: #{tpu_custom_call.1} parent=5 // pred_fallthru
        _
    $region6: #{tpu_custom_call.1} parent=1 // loop_footer
      %s20 = sadd.s32 1, %s16
    $region7: #{tpu_custom_call.1} parent=1 // loop_footer_branch
      %15 = sbr.rel target = $region3
    $region8: #{tpu_custom_call.1} parent=1 // loop_exit
      _
    %830 = vsyncpa [#allocation4], 1
    %s831 = scalar_lea.sflag [#allocation4], 1
    %832 = vsyncpa %s831, 1
    %833 = vsyncpa [#allocation7], 1
    %s834 = scalar_lea.sflag [#allocation7], 1
    %835 = vsyncpa %s834, 1
    %836 = vsyncpa [#allocation5], 1
    %s837 = scalar_lea.sflag [#allocation5], 1
    %838 = vsyncpa %s837, 1

</llo_original>
